<compile_context>
chip_gen: v5e
topology: v5e:2x2
jax: 0.10.0
libtpu: 0.0.40
codegen_flags: <defaults>
</compile_context>

<pallas_src>
import jax
import jax.numpy as jnp
from jax import lax
from jax.experimental import pallas as pl
from jax.experimental.pallas import tpu as pltpu


def _round_up(x, m):
    return ((x + m - 1) // m) * m


def _cdiv(a, b):
    return -(-a // b)


def _is_v7x():
    """Best-effort TPU generation sniff (v7x: 2 TensorCores, 64 MiB VMEM/TC)."""
    try:
        kind = jax.devices()[0].device_kind.lower()
    except Exception:
        return False
    return "7" in kind


def _default_k_tile(F, cap=4096):
    """Largest lane-aligned K tile (<= cap) that divides F exactly.

    Avoids materializing zero-padded HBM copies of x and W_enc.
    Real CLIP: F = 3*224*224 = 150528 = 1176*128 -> TF = 3584.
    """
    if F % 128 == 0:
        best = 0
        t = 128
        while t <= min(F, cap):
            if F % t == 0:
                best = t
            t += 128
        if best:
            return best
    return min(_round_up(F, 128), 2048)


def _default_batch_tile(B, is_v7x):
    """Generation-aware batch tile.

    v5e/v6e: single TensorCore -> one big tile (up to 512 rows) so W_enc is
    re-streamed from HBM as few times as possible; prefer a tile that divides
    B exactly so no padded copy of x is materialized.
    v7x: two TensorCores share the "parallel" batch axis -> an even number of
    tiles (>= 2) of at most ~512 rows each.
    """
    Bp8 = _round_up(B, 8)
    cap = 512
    if is_v7x:
        n = max(2, _cdiv(Bp8, cap))
        if n % 2:
            n += 1
        return _round_up(_cdiv(Bp8, n), 8)
    if Bp8 <= cap:
        return Bp8
    if B % 8 == 0:
        # Largest divisor of B (multiple of 8) in [cap/4, cap]: no batch pad.
        for t in range(cap, cap // 4 - 1, -8):
            if B % t == 0:
                return t
    return cap


def prepare_label_features(label_features, *, compute_dtype=jnp.bfloat16,
                           lane_multiple=256):
    """One-time label prep (analogue of the torch buffer in __init__).

    label_features: [L, D], already L2-normalized.
    Returns (lab_T, L) with lab_T of shape (D, Lp), Lp a multiple of
    `lane_multiple` (256 fills the v6e/v7x 2x256^2 MXU N dim), zero-padded
    columns (-> zero logits, sliced off by the forward), cast to the compute
    dtype so the classify dot runs on the fast bf16 MXU path.
    """
    L, D = label_features.shape
    Lp = _round_up(L, lane_multiple)
    lab = label_features
    if compute_dtype is not None and lab.dtype != compute_dtype:
        lab = lab.astype(compute_dtype)
    lab_T = jnp.zeros((D, Lp), dtype=lab.dtype)
    lab_T = lab_T.at[:, :L].set(lab.T)
    return lab_T, L


def _clip0shot_kernel(x_ref, wenc_ref, labT_ref, out_ref, acc_ref):
    """Fused encode -> L2 normalize -> logits, K-tiled over F.

    x_ref:    (TB, TF)   flattened image pixel tile        (compute dtype)
    wenc_ref: (TF, D)    synthetic encoder weight K-tile   (compute dtype)
    labT_ref: (D,  Lp)   L2-normalized labels, transposed, lane-padded
    out_ref:  (TB, Lp)   f32 logits tile (resident across the K axis)
    acc_ref:  (TB, D)    f32 accumulator scratch (VMEM)
    """
    k = pl.program_id(1)

    @pl.when(k == 0)
    def _init():
        acc_ref[...] = jnp.zeros_like(acc_ref)

    # "encode_image": partial linear projection on the MXU, f32 accumulation.
    acc_ref[...] += jnp.dot(x_ref[...], wenc_ref[...],
                            preferred_element_type=jnp.float32)

    # Epilogue only once per output tile, on the final K step: keeps the inner
    # loop a pure MXU + DMA pipeline.
    @pl.when(k == pl.num_programs(1) - 1)
    def _finalize():
        feats = acc_ref[...]                                        # (TB, D)
        # image_features / image_features.norm(dim=-1, keepdim=True)
        # No eps, matching the PyTorch reference: all-zero rows (including
        # zero-padded batch rows when Bp > B) produce inf/NaN exactly like
        # torch would; padded rows are sliced off before returning.
        sq = jnp.sum(feats * feats, axis=-1, keepdims=True)         # (TB, 1)
        feats_n = feats * lax.rsqrt(sq)                             # (TB, D)
        # logits = image_features @ label_features.T  (lane-dense Lp).
        # Cast to the label dtype so bf16 labels hit the fast bf16 MXU path.
        logits = jnp.dot(feats_n.astype(labT_ref.dtype), labT_ref[...],
                         preferred_element_type=jnp.float32)        # (TB, Lp)
        out_ref[...] = logits.astype(out_ref.dtype)


def clip0shot_forward(x_nchw, w_enc, label_features=None, *,
                      prepared_labels=None, num_labels=None,
                      batch_tile=None, k_tile=None,
                      compute_dtype=jnp.bfloat16, vmem_limit_bytes=None):
    """x_nchw: [B, C, H, W]; w_enc: [C*H*W, D]; label_features: [L, D]
    (already L2-normalized, as in Clip0Shot.__init__). Returns f32 logits [B, L].

    For repeated inference, call prepare_label_features() once and pass
    prepared_labels/num_labels (and store w_enc / feed x already in
    compute_dtype) so no per-call pad / transpose / cast ops are emitted.
    """
    B, C, H, W = x_nchw.shape
    F = C * H * W
    D = w_enc.shape[1]

    is_v7x = _is_v7x()

    # ---- one-time-style glue (outside the kernel) ----------------------
    if prepared_labels is not None:
        assert num_labels is not None, "pass num_labels with prepared_labels"
        lab_T, L = prepared_labels, num_labels
    else:
        assert label_features is not None
        lab_T, L = prepare_label_features(label_features,
                                          compute_dtype=compute_dtype)
    Lp = lab_T.shape[1]

    x_flat = x_nchw.reshape(B, F)            # row-major NCHW flatten
    if compute_dtype is not None and x_flat.dtype != compute_dtype:
        x_flat = x_flat.astype(compute_dtype)
    if compute_dtype is not None and w_enc.dtype != compute_dtype:
        w_enc = w_enc.astype(compute_dtype)

    # Batch tile: sublane-aligned, generation aware.
    TB = _default_batch_tile(B, is_v7x) if batch_tile is None else batch_tile
    assert TB % 8 == 0
    Bp = _round_up(B, TB)

    # K tile over F: lane-aligned; default divides F exactly (no padded copy).
    TF = _default_k_tile(F) if k_tile is None else k_tile
    assert TF % 128 == 0
    Fp = _round_up(F, TF)

    # Zero-pad only when strictly needed (zeros don't change the matmul).
    if Fp != F:
        w_enc = jnp.zeros((Fp, D), dtype=w_enc.dtype).at[:F, :].set(w_enc)
        x_flat = jnp.zeros((B, Fp), dtype=x_flat.dtype).at[:, :F].set(x_flat)
    if Bp != B:
        x_flat = jnp.zeros((Bp, Fp), dtype=x_flat.dtype).at[:B, :].set(x_flat)

    grid = (Bp // TB, Fp // TF)              # (batch tiles, K tiles)

    # VMEM budget (dtype-aware): double-buffered x / W_enc / out tiles,
    # resident labT (2 bufs at default pipelining), f32 accumulator scratch.
    if vmem_limit_bytes is None:
        xb = jnp.dtype(x_flat.dtype).itemsize
        wb = jnp.dtype(w_enc.dtype).itemsize
        lb = jnp.dtype(lab_T.dtype).itemsize
        tile_bytes = (2 * xb * TB * TF
                      + 2 * wb * TF * D
                      + 2 * lb * D * Lp
                      + 2 * 4 * TB * Lp
                      + 4 * TB * D)
        cap = (48 << 20) if is_v7x else (100 << 20)   # 64 vs 128 MiB physical
        vmem_limit_bytes = min(max(int(1.4 * tile_bytes), 32 << 20), cap)

    out = pl.pallas_call(
        _clip0shot_kernel,
        out_shape=jax.ShapeDtypeStruct((Bp, Lp), jnp.float32),
        grid_spec=pltpu.PrefetchScalarGridSpec(
            num_scalar_prefetch=0,
            grid=grid,
            in_specs=[
                pl.BlockSpec((TB, TF), lambda i, k: (i, k)),   # x tile
                pl.BlockSpec((TF, D), lambda i, k: (k, 0)),    # W_enc K-tile
                pl.BlockSpec((D, Lp), lambda i, k: (0, 0)),    # labT (resident)
            ],
            out_specs=pl.BlockSpec((TB, Lp), lambda i, k: (i, 0)),
            scratch_shapes=[pltpu.VMEM((TB, D), jnp.float32)],
        ),
        compiler_params=pltpu.CompilerParams(
            dimension_semantics=("parallel", "arbitrary"),
            vmem_limit_bytes=vmem_limit_bytes),
    )(x_flat, w_enc, lab_T)

    return out[:B, :L]


def _reference(x_nchw, w_enc, label_features):
    B = x_nchw.shape[0]
    feats = x_nchw.reshape(B, -1) @ w_enc
    feats = feats / jnp.linalg.norm(feats, axis=-1, keepdims=True)
    return feats @ label_features.T


if __name__ == "__main__":
    key = jax.random.PRNGKey(0)
    k_x, k_w, k_lab = jax.random.split(key, 3)

    # Small, module-consistent shapes (NCHW images).
    B, C, H, W = 16, 4, 16, 16      # F = 1024
    D = 128                         # CLIP embedding dim (synthetic)
    L = 8                           # number of text labels

    x = jax.random.normal(k_x, (B, C, H, W), dtype=jnp.float32)

    # Synthetic deterministic "encoder" weight (stand-in for encode_image).
    w_enc = jax.random.normal(k_w, (C * H * W, D), dtype=jnp.float32) * 0.02

    # label_features: encode_text output, L2-normalized in __init__.
    lab = jax.random.normal(k_lab, (L, D), dtype=jnp.float32)
    lab = lab / jnp.linalg.norm(lab, axis=-1, keepdims=True)

    ref = _reference(x, w_enc, lab)

    # 1) Exact-math path (f32 compute), small tiles so several batch
    #    ("parallel") steps and K accumulation steps are exercised.
    logits_f32 = clip0shot_forward(x, w_enc, lab, batch_tile=8, k_tile=256,
                                   compute_dtype=jnp.float32)
    logits_f32 = jax.block_until_ready(logits_f32)
    assert logits_f32.shape == (B, L)
    assert jnp.allclose(logits_f32, ref, atol=1e-4, rtol=1e-4)

    # 2) Default production path: bf16 MXU compute + one-time prepared labels.
    lab_T, n_lab = prepare_label_features(lab, compute_dtype=jnp.bfloat16)
    logits_bf16 = clip0shot_forward(x, w_enc,
                                    prepared_labels=lab_T, num_labels=n_lab,
                                    batch_tile=8, k_tile=256)
    logits_bf16 = jax.block_until_ready(logits_bf16)
    assert logits_bf16.shape == (B, L)
    assert jnp.allclose(logits_bf16, ref, atol=5e-2, rtol=5e-2)

    print("KERNEL_OK")
</pallas_src>

<mosaic_0001>
module attributes {stable_mosaic.version = 11 : i64} {
  func.func @_clip0shot_kernel(%arg0: i32, %arg1: i32, %arg2: memref<8x256xf32, #tpu.memory_space<vmem>>, %arg3: memref<256x128xf32, #tpu.memory_space<vmem>>, %arg4: memref<128x256xf32, #tpu.memory_space<vmem>>, %arg5: memref<8x256xf32, #tpu.memory_space<vmem>>, %arg6: memref<8x128xf32, #tpu.memory_space<vmem>>) attributes {dimension_semantics = [#tpu.dimension_semantics<parallel>, #tpu.dimension_semantics<arbitrary>], iteration_bounds = array<i64: 2, 4>, scalar_prefetch = 0 : i64, scratch_operands = 1 : i64, tpu.core_type = #tpu.core_type<tc>, window_params = [{transform_indices = @transform_0, window_bounds = array<i64: 8, 256>}, {transform_indices = @transform_1, window_bounds = array<i64: 256, 128>}, {pipeline_mode = #tpu.pipeline_mode<synchronous>, transform_indices = @transform_2, window_bounds = array<i64: 128, 256>}, {transform_indices = @transform_3, window_bounds = array<i64: 8, 256>}]} {
    %c0_i32 = arith.constant 0 : i32
    %0 = arith.cmpi eq, %arg1, %c0_i32 : i32
    %1 = arith.extui %0 : i1 to i32
    %c0_i32_0 = arith.constant 0 : i32
    %2 = arith.cmpi ne, %1, %c0_i32_0 : i32
    scf.if %2 {
      %cst_9 = arith.constant 0.000000e+00 : f32
      %12 = vector.broadcast %cst_9 : f32 to vector<8x128xf32>
      %c0_10 = arith.constant 0 : index
      %c0_11 = arith.constant 0 : index
      %13 = vector.load %arg6[%c0_10, %c0_11] : memref<8x128xf32, #tpu.memory_space<vmem>>, vector<8x128xf32>
      tpu.vector_store %arg6[%c0_10, %c0_11], %12 {strides = array<i32>} : memref<8x128xf32, #tpu.memory_space<vmem>>, vector<8x128xf32>,
    } else {
    }
    %c0 = arith.constant 0 : index
    %c0_1 = arith.constant 0 : index
    %3 = vector.load %arg6[%c0, %c0_1] : memref<8x128xf32, #tpu.memory_space<vmem>>, vector<8x128xf32>
    %c0_2 = arith.constant 0 : index
    %c0_3 = arith.constant 0 : index
    %4 = vector.load %arg2[%c0_2, %c0_3] : memref<8x256xf32, #tpu.memory_space<vmem>>, vector<8x256xf32>
    %c0_4 = arith.constant 0 : index
    %c0_5 = arith.constant 0 : index
    %5 = vector.load %arg3[%c0_4, %c0_5] : memref<256x128xf32, #tpu.memory_space<vmem>>, vector<256x128xf32>
    %cst = arith.constant dense<0.000000e+00> : vector<8x128xf32>
    %6 = tpu.matmul %4, %5, %cst {dimension_numbers = #tpu.dot_dimension_numbers<[1], [0], [0], [1], [0, 0, 1, 1], [], []>} : vector<8x256xf32>, vector<256x128xf32>, vector<8x128xf32> -> vector<8x128xf32>
    %7 = arith.addf %3, %6 : vector<8x128xf32>
    %c0_6 = arith.constant 0 : index
    %c0_7 = arith.constant 0 : index
    %8 = vector.load %arg6[%c0_6, %c0_7] : memref<8x128xf32, #tpu.memory_space<vmem>>, vector<8x128xf32>
    tpu.vector_store %arg6[%c0_6, %c0_7], %7 {strides = array<i32>} : memref<8x128xf32, #tpu.memory_space<vmem>>, vector<8x128xf32>,
    %c3_i32 = arith.constant 3 : i32
    %9 = arith.cmpi eq, %arg1, %c3_i32 : i32
    %10 = arith.extui %9 : i1 to i32
    %c0_i32_8 = arith.constant 0 : i32
    %11 = arith.cmpi ne, %10, %c0_i32_8 : i32
    scf.if %11 {
      %c0_9 = arith.constant 0 : index
      %c0_10 = arith.constant 0 : index
      %12 = vector.load %arg6[%c0_9, %c0_10] : memref<8x128xf32, #tpu.memory_space<vmem>>, vector<8x128xf32>
      %13 = arith.mulf %12, %12 : vector<8x128xf32>
      %cst_11 = arith.constant dense<0.000000e+00> : vector<8xf32>
      %14 = vector.multi_reduction <add>, %13, %cst_11 [1] : vector<8x128xf32> to vector<8xf32>
      %15 = vector.shape_cast %14 : vector<8xf32> to vector<8x1xf32>
      %16 = math.rsqrt %15 : vector<8x1xf32>
      %17 = vector.broadcast %16 : vector<8x1xf32> to vector<8x128xf32>
      %18 = arith.mulf %12, %17 : vector<8x128xf32>
      %c0_12 = arith.constant 0 : index
      %c0_13 = arith.constant 0 : index
      %19 = vector.load %arg4[%c0_12, %c0_13] : memref<128x256xf32, #tpu.memory_space<vmem>>, vector<128x256xf32>
      %cst_14 = arith.constant dense<0.000000e+00> : vector<8x256xf32>
      %20 = tpu.matmul %18, %19, %cst_14 {dimension_numbers = #tpu.dot_dimension_numbers<[1], [0], [0], [1], [0, 0, 1, 1], [], []>} : vector<8x128xf32>, vector<128x256xf32>, vector<8x256xf32> -> vector<8x256xf32>
      %c0_15 = arith.constant 0 : index
      %c0_16 = arith.constant 0 : index
      %21 = vector.load %arg5[%c0_15, %c0_16] : memref<8x256xf32, #tpu.memory_space<vmem>>, vector<8x256xf32>
      tpu.vector_store %arg5[%c0_15, %c0_16], %20 {strides = array<i32>} : memref<8x256xf32, #tpu.memory_space<vmem>>, vector<8x256xf32>,
    } else {
    }
    return
  }
  func.func @transform_0(%arg0: i32, %arg1: i32) -> (i32, i32) {
    %c0_i32 = arith.constant 0 : i32
    return %arg0, %arg1 : i32, i32
  }
  func.func @transform_1(%arg0: i32, %arg1: i32) -> (i32, i32) {
    %c0_i32 = arith.constant 0 : i32
    %c0_i32_0 = arith.constant 0 : i32
    return %arg1, %c0_i32 : i32, i32
  }
  func.func @transform_2(%arg0: i32, %arg1: i32) -> (i32, i32) {
    %c0_i32 = arith.constant 0 : i32
    %c0_i32_0 = arith.constant 0 : i32
    %c0_i32_1 = arith.constant 0 : i32
    return %c0_i32, %c0_i32_0 : i32, i32
  }
  func.func @transform_3(%arg0: i32, %arg1: i32) -> (i32, i32) {
    %c0_i32 = arith.constant 0 : i32
    %c0_i32_0 = arith.constant 0 : i32
    return %arg0, %c0_i32 : i32, i32
  }
}

</mosaic_0001>

<llo_original>
// kernel: tpu_custom_call.1
$region0: #{tpu_custom_call.1}
  #allocation0 [shape = 'u32[]', space=smem, size = 0x4, offset = 0x4, fixed_abs, tag = 'smem constant byte address 0x4 - core index']
  #allocation1 [shape = 'u32[72,128]{1,0:T(1,128)}', space=vmem, size = 0x9000, scoped, tag = 'internal scratch']
  #allocation2 [shape = 'f32[8,128]{1,0:T(8,128)}', space=vmem, size = 0x1000, scoped, tag = 'scratch operand']
  %s0 = inlined_call_operand.hbm [shape: f32[16,1024], index: 0, kind: input, shape index: {}]
  %s1 = inlined_call_operand.hbm [shape: f32[1024,128], index: 1, kind: input, shape index: {}]
  %s2 = inlined_call_operand.hbm [shape: f32[128,256], index: 2, kind: input, shape index: {}]
  %s3 = inlined_call_operand.hbm [shape: f32[16,256], index: 3, kind: output, shape index: {}]
  %s4 = sld [smem:[#allocation0]]
  $region65: #{tpu_custom_call.1} parent=0
    _
  %s6 = ssub.s32 1, %s4
  %s7 = scalar_select 0, %s6, %s4
  $region1: #{tpu_custom_call.1} parent=0
    #allocation3 [shape = 'u8[16384]{0}', space=vmem, size = 0x4000, scoped, tag = 'input window, operand 0']
    #allocation4 [shape = 's32[2]{0}', space=sflag, size = 0x8, scoped, tag = 'scoped memory for tpu_custom_call.1']
    #allocation5 [shape = 's32[2]{0}', space=sflag, size = 0x8, scoped, tag = 'scoped memory for tpu_custom_call.1']
    #allocation6 [shape = 'u8[262144]{0}', space=vmem, size = 0x40000, scoped, tag = 'input window, operand 1']
    #allocation7 [shape = 's32[2]{0}', space=sflag, size = 0x8, scoped, tag = 'scoped memory for tpu_custom_call.1']
    #allocation8 [shape = 'u8[131072]{0}', space=vmem, size = 0x20000, scoped, tag = 'input window, operand 2, single buffered']
    #allocation9 [shape = 'u8[16384]{0}', space=vmem, size = 0x4000, scoped, tag = 'output window, operand 0']
    %8 = vsyncpa [#allocation4], 0
    %s9 = scalar_lea.sflag [#allocation4], 1
    %10 = vsyncpa %s9, 0
    %11 = vsyncpa [#allocation7], 0
    %s12 = scalar_lea.sflag [#allocation7], 1
    %13 = vsyncpa %s12, 0
    %14 = vsyncpa [#allocation5], 0
    %s15 = scalar_lea.sflag [#allocation5], 1
    %16 = vsyncpa %s15, 0
    loop: start=0, step=1, limit=10
    $region2: #{tpu_custom_call.1} parent=1 // loop_pre_header
      _
    $region3: #{tpu_custom_call.1} parent=1 // loop_header
      %s18 = sphi 0, %s22
      %p19 = scmp.ge.s32.totalorder %s18, 10
      %s25 = sphi 0, %s37
      %s26 = sphi 0, %s33
      %s27 = sphi 0, %s25
      %s28 = sphi 0, %s26
      %s29 = sphi 0, %s27
      %s30 = sphi 0, %s28
      %s42 = sphi 0, %s44
      %s45 = sphi 0, %s42
      %s46 = sphi 0, %s45
      %s62 = sphi 0, %s46
      %s68 = sphi 0, %s70
      %s71 = sphi 0, %s68
      %s72 = sphi 0, %s71
      %s88 = sphi 0, %s72
      %s92 = sphi 0, %s92
      %s94 = sphi 0, %s92
      %s95 = sphi 0, %s94
      %s109 = sphi 0, %s95
      %s115 = sphi 0, %s117
      %s118 = sphi 0, %s115
      %s119 = sphi 0, %s118
      %s135 = sphi 0, %s119
    $region4: #{tpu_custom_call.1} parent=1 // loop_header_branch
      %21 = sbr.rel (%p19) target = $region8
    $region5: #{tpu_custom_call.1} parent=1 // loop_body
      %s23 = ssub.s32 %s18, 1
      %s24 = ssub.s32 %s18, 2
      %s31 = sadd.s32 1, %s26
      %p32 = scmp.ge.s32.totalorder %s31, 4
      %s33 = scalar_select %p32, 0, %s31
      %s34 = sadd.s32 1, %s25
      %s35 = scalar_select %p32, %s34, %s25
      %p36 = scmp.ge.s32.totalorder %s35, 2
      %s37 = scalar_select %p36, 0, %s35
      %s38 = ssub.s32 %s25, %s37
      %s39 = ssub.s32 %s26, %s33
      %s40 = sor.u32 %s38, %s39
      %p41 = scmp.eq.s32.totalorder %s40, 0
      %s43 = sadd.s32 %s42, 1
      %s44 = scalar_select %p41, %s42, %s43
      %p47 = pneg %p41
      %p48 = scmp.eq.s32.totalorder %s18, 7
      %p49 = por %p47, %p48
      %p50 = scmp.ne.s32.totalorder %s42, %s45
      %p51 = scmp.eq.s32.totalorder %s18, 0
      %p52 = por %p50, %p51
      %p53 = scmp.ne.s32.totalorder %s42, %s45
      %p54 = scmp.eq.s32.totalorder %s23, 7
      %p55 = por %p53, %p54
      %p56 = scmp.ne.s32.totalorder %s45, %s46
      %p57 = scmp.eq.s32.totalorder %s23, 0
      %p58 = por %p56, %p57
      %p59 = scmp.ne.s32.totalorder %s45, %s46
      %p60 = scmp.eq.s32.totalorder %s24, 7
      %p61 = por %p59, %p60
      %p63 = scmp.ne.s32.totalorder %s46, %s62
      %p64 = scmp.eq.s32.totalorder %s24, 0
      %p65 = por %p63, %p64
      %s66 = ssub.s32 %s26, %s33
      %p67 = scmp.eq.s32.totalorder %s66, 0
      %s69 = sadd.s32 %s68, 1
      %s70 = scalar_select %p67, %s68, %s69
      %p73 = pneg %p67
      %p74 = scmp.eq.s32.totalorder %s18, 7
      %p75 = por %p73, %p74
      %p76 = scmp.ne.s32.totalorder %s68, %s71
      %p77 = scmp.eq.s32.totalorder %s18, 0
      %p78 = por %p76, %p77
      %p79 = scmp.ne.s32.totalorder %s68, %s71
      %p80 = scmp.eq.s32.totalorder %s23, 7
      %p81 = por %p79, %p80
      %p82 = scmp.ne.s32.totalorder %s71, %s72
      %p83 = scmp.eq.s32.totalorder %s23, 0
      %p84 = por %p82, %p83
      %p85 = scmp.ne.s32.totalorder %s71, %s72
      %p86 = scmp.eq.s32.totalorder %s24, 7
      %p87 = por %p85, %p86
      %p89 = scmp.ne.s32.totalorder %s72, %s88
      %p90 = scmp.eq.s32.totalorder %s24, 0
      %p91 = por %p89, %p90
      %s93 = sadd.s32 %s92, 1
      %p96 = scmp.eq.s32.totalorder %s18, 7
      %p97 = scmp.ne.s32.totalorder %s92, %s94
      %p98 = scmp.eq.s32.totalorder %s18, 0
      %p99 = por %p97, %p98
      %p100 = scmp.ne.s32.totalorder %s92, %s94
      %p101 = scmp.eq.s32.totalorder %s23, 7
      %p102 = por %p100, %p101
      %p103 = scmp.ne.s32.totalorder %s94, %s95
      %p104 = scmp.eq.s32.totalorder %s23, 0
      %p105 = por %p103, %p104
      %p106 = scmp.ne.s32.totalorder %s94, %s95
      %p107 = scmp.eq.s32.totalorder %s24, 7
      %p108 = por %p106, %p107
      %p110 = scmp.ne.s32.totalorder %s95, %s109
      %p111 = scmp.eq.s32.totalorder %s24, 0
      %p112 = por %p110, %p111
      %s113 = ssub.s32 %s25, %s37
      %p114 = scmp.eq.s32.totalorder %s113, 0
      %s116 = sadd.s32 %s115, 1
      %s117 = scalar_select %p114, %s115, %s116
      %p120 = pneg %p114
      %p121 = scmp.eq.s32.totalorder %s18, 7
      %p122 = por %p120, %p121
      %p123 = scmp.ne.s32.totalorder %s115, %s118
      %p124 = scmp.eq.s32.totalorder %s18, 0
      %p125 = por %p123, %p124
      %p126 = scmp.ne.s32.totalorder %s115, %s118
      %p127 = scmp.eq.s32.totalorder %s23, 7
      %p128 = por %p126, %p127
      %p129 = scmp.ne.s32.totalorder %s118, %s119
      %p130 = scmp.eq.s32.totalorder %s23, 0
      %p131 = por %p129, %p130
      %p132 = scmp.ne.s32.totalorder %s118, %s119
      %p133 = scmp.eq.s32.totalorder %s24, 7
      %p134 = por %p132, %p133
      %p136 = scmp.ne.s32.totalorder %s119, %s135
      %p137 = scmp.eq.s32.totalorder %s24, 0
      %p138 = por %p136, %p137
      %p139 = scmp.le.s32.totalorder 1, %s18
      %p140 = scmp.lt.s32.totalorder %s18, 9
      %p141 = pnand %p139, %p140
      %p142 = pneg %p141
      // Predicated region
      $region9: #{tpu_custom_call.1} parent=5 // pred_check
        _
      $region10: #{tpu_custom_call.1} parent=5 // pred_check_branch
        %144 = sbr.rel (%p141) target = $region12
      $region11: #{tpu_custom_call.1} parent=5 // pred_region
        %s145 = ssub.s32 %s18, 1
        // Predicated region
        $region13: #{tpu_custom_call.1} parent=11 // pred_check
          %p146 = pneg %p105
        $region14: #{tpu_custom_call.1} parent=11 // pred_check_branch
          %148 = sbr.rel (%p146) target = $region16
        $region15: #{tpu_custom_call.1} parent=11 // pred_region
          %150 = vsyncadd [#allocation7], 0
          %s151 = sshll.u32 %s2, 4
          %s152 = int_to_ptr.hbm [resolvable:$true] %s151
          %s153 = sshll.u32 [#allocation8], 4
          %s154 = int_to_ptr.vmem [resolvable:$true] %s153
          %159 = dma.hbm_to_vmem [thread:$0]  %s152, 4096, %s154, [#allocation7], 256, 256, 16
        $region16: #{tpu_custom_call.1} parent=11 // pred_fallthru
          _
      $region12: #{tpu_custom_call.1} parent=5 // pred_fallthru
        _
      %p160 = scmp.lt.s32.totalorder %s18, 8
      // Predicated region
      $region17: #{tpu_custom_call.1} parent=5 // pred_check
        %p161 = pneg %p160
      $region18: #{tpu_custom_call.1} parent=5 // pred_check_branch
        %163 = sbr.rel (%p161) target = $region20
      $region19: #{tpu_custom_call.1} parent=5 // pred_region
        // Predicated region
        $region21: #{tpu_custom_call.1} parent=19 // pred_check
          %p164 = pneg %p52
        $region22: #{tpu_custom_call.1} parent=19 // pred_check_branch
          %166 = sbr.rel (%p164) target = $region24
        $region23: #{tpu_custom_call.1} parent=19 // pred_region
          %s167 = sand.u32 %s42, 1
          %s168 = scalar_lea.sflag [#allocation4], %s167
          %s169 = sand.u32 %s42, 1
          %s170 = smul.addr %s169, 16
          %s171 = scalar_lea.vmem [#allocation3], %s170
          %s172 = smul.u32 2, %s26
          %174 = vsyncadd %s168, 0
          %s175 = smul.addr %s25, 8
          %s176 = sadd.s32 %s172, %s175
          %s177 = smul.addr %s176, 8
          %s178 = scalar_lea.hbm %s0, %s177
          %s180 = sshll.u32 %s178, 4
          %s181 = int_to_ptr.hbm [resolvable:$true] %s180
          %s182 = sshll.u32 %s171, 4
          %s183 = int_to_ptr.vmem [resolvable:$true] %s182
          %185 = dma.hbm_to_vmem [thread:$0]  %s181, 256, %s183, %s168
        $region24: #{tpu_custom_call.1} parent=19 // pred_fallthru
          _
        // Predicated region
        $region25: #{tpu_custom_call.1} parent=19 // pred_check
          %p186 = pneg %p78
        $region26: #{tpu_custom_call.1} parent=19 // pred_check_branch
          %188 = sbr.rel (%p186) target = $region28
        $region27: #{tpu_custom_call.1} parent=19 // pred_region
          %s189 = sand.u32 %s18, 1
          %s190 = scalar_lea.sflag [#allocation7], %s189
          %s191 = sand.u32 %s68, 1
          %s192 = smul.addr %s191, 256
          %s193 = scalar_lea.vmem [#allocation6], %s192
          %s194 = smul.u32 32, %s26
          %196 = vsyncadd %s190, 0
          %s197 = smul.addr %s194, 8
          %s198 = scalar_lea.hbm %s1, %s197
          %s199 = sshll.u32 %s198, 4
          %s200 = int_to_ptr.hbm [resolvable:$true] %s199
          %s201 = sshll.u32 %s193, 4
          %s202 = int_to_ptr.vmem [resolvable:$true] %s201
          %207 = dma.hbm_to_vmem [thread:$0]  %s200, 4096, %s202, %s190, 128, 128, 8
        $region28: #{tpu_custom_call.1} parent=19 // pred_fallthru
          _
      $region20: #{tpu_custom_call.1} parent=5 // pred_fallthru
        _
      %p208 = scmp.le.s32.totalorder 1, %s18
      %p209 = scmp.lt.s32.totalorder %s18, 9
      %p210 = pnand %p208, %p209
      %p211 = pneg %p210
      // Predicated region
      $region29: #{tpu_custom_call.1} parent=5 // pred_check
        _
      $region30: #{tpu_custom_call.1} parent=5 // pred_check_branch
        %213 = sbr.rel (%p210) target = $region32
      $region31: #{tpu_custom_call.1} parent=5 // pred_region
        %s214 = ssub.s32 %s18, 1
        %s215 = sand.u32 %s45, 1
        %s216 = scalar_lea.sflag [#allocation4], %s215
        %s217 = sand.u32 %s45, 1
        %s218 = smul.addr %s217, 16
        %s219 = scalar_lea.vmem [#allocation3], %s218
        // Predicated region
        $region33: #{tpu_custom_call.1} parent=31 // pred_check
          %p220 = pneg %p58
        $region34: #{tpu_custom_call.1} parent=31 // pred_check_branch
          %222 = sbr.rel (%p220) target = $region36
        $region35: #{tpu_custom_call.1} parent=31 // pred_region
          %224 = dma.done %s216, 256
        $region36: #{tpu_custom_call.1} parent=31 // pred_fallthru
          _
        %s225 = sand.u32 %s23, 1
        %s226 = scalar_lea.sflag [#allocation7], %s225
        %s227 = sand.u32 %s71, 1
        %s228 = smul.addr %s227, 256
        %s229 = scalar_lea.vmem [#allocation6], %s228
        // Predicated region
        $region37: #{tpu_custom_call.1} parent=31 // pred_check
          %p230 = pneg %p84
        $region38: #{tpu_custom_call.1} parent=31 // pred_check_branch
          %232 = sbr.rel (%p230) target = $region40
        $region39: #{tpu_custom_call.1} parent=31 // pred_region
          %234 = dma.done %s226, 4096
        $region40: #{tpu_custom_call.1} parent=31 // pred_fallthru
          _
        // Predicated region
        $region41: #{tpu_custom_call.1} parent=31 // pred_check
          %p235 = pneg %p105
        $region42: #{tpu_custom_call.1} parent=31 // pred_check_branch
          %237 = sbr.rel (%p235) target = $region44
        $region43: #{tpu_custom_call.1} parent=31 // pred_region
          %239 = dma.done [#allocation7], 4096
        $region44: #{tpu_custom_call.1} parent=31 // pred_fallthru
          _
        %s240 = sand.u32 %s45, 1
        %s241 = scalar_lea.sflag [#allocation4], %s240
        %s242 = sand.u32 %s45, 1
        %s243 = smul.addr %s242, 16
        %s244 = scalar_lea.vmem [#allocation3], %s243
        %p245 = pneg %p58
        %p246 = pneg %p55
        %s247 = sand.u32 %s23, 1
        %s248 = scalar_lea.sflag [#allocation7], %s247
        %s249 = sand.u32 %s71, 1
        %s250 = smul.addr %s249, 256
        %s251 = scalar_lea.vmem [#allocation6], %s250
        %p252 = pneg %p84
        %p253 = pneg %p81
        %p254 = pneg %p105
        %p255 = pneg %p102
        %p256 = pneg %p131
        %p257 = pneg %p128
        %s258 = sand.u32 %s118, 1
        %s259 = scalar_lea.sflag [#allocation5], %s258
        %s260 = sand.u32 %s118, 1
        %s261 = smul.addr %s260, 16
        %s262 = scalar_lea.vmem [#allocation9], %s261
        %s263 = smul.u32 2, %s28
        %s264 = smul.u32 32, %s28
        %p265 = scmp.eq.s32.totalorder %s28, 0
        // Predicated region
        $region45: #{tpu_custom_call.1} parent=31 // pred_check
          %p266 = pneg %p265
        $region46: #{tpu_custom_call.1} parent=31 // pred_check_branch
          %268 = sbr.rel (%p266) target = $region48
        $region47: #{tpu_custom_call.1} parent=31 // pred_region
          %269 = vst [vmem:[#allocation2] sm:$0xff] 0.0
        $region48: #{tpu_custom_call.1} parent=31 // pred_fallthru
          _
        %v270 = vld [vmem:[#allocation2] sm:$0xff]
        %v271 = vld [vmem:[%s219] sm:$0xff]
        %v272 = vld [vmem:[%s219 + $0x8] sm:$0xff]
        %v273 = vld [vmem:[%s229] sm:$0xff]
        %v274 = vld [vmem:[%s229 + $0x8] sm:$0xff]
        %v275 = vld [vmem:[%s229 + $0x10] sm:$0xff]
        %v276 = vld [vmem:[%s229 + $0x18] sm:$0xff]
        %v277 = vld [vmem:[%s229 + $0x20] sm:$0xff]
        %v278 = vld [vmem:[%s229 + $0x28] sm:$0xff]
        %v279 = vld [vmem:[%s229 + $0x30] sm:$0xff]
        %v280 = vld [vmem:[%s229 + $0x38] sm:$0xff]
        %v281 = vld [vmem:[%s229 + $0x40] sm:$0xff]
        %v282 = vld [vmem:[%s229 + $0x48] sm:$0xff]
        %v283 = vld [vmem:[%s229 + $0x50] sm:$0xff]
        %v284 = vld [vmem:[%s229 + $0x58] sm:$0xff]
        %v285 = vld [vmem:[%s229 + $0x60] sm:$0xff]
        %v286 = vld [vmem:[%s229 + $0x68] sm:$0xff]
        %v287 = vld [vmem:[%s229 + $0x70] sm:$0xff]
        %v288 = vld [vmem:[%s229 + $0x78] sm:$0xff]
        %v289 = vld [vmem:[%s229 + $0x80] sm:$0xff]
        %v290 = vld [vmem:[%s229 + $0x88] sm:$0xff]
        %v291 = vld [vmem:[%s229 + $0x90] sm:$0xff]
        %v292 = vld [vmem:[%s229 + $0x98] sm:$0xff]
        %v293 = vld [vmem:[%s229 + $0xa0] sm:$0xff]
        %v294 = vld [vmem:[%s229 + $0xa8] sm:$0xff]
        %v295 = vld [vmem:[%s229 + $0xb0] sm:$0xff]
        %v296 = vld [vmem:[%s229 + $0xb8] sm:$0xff]
        %v297 = vld [vmem:[%s229 + $0xc0] sm:$0xff]
        %v298 = vld [vmem:[%s229 + $0xc8] sm:$0xff]
        %v299 = vld [vmem:[%s229 + $0xd0] sm:$0xff]
        %v300 = vld [vmem:[%s229 + $0xd8] sm:$0xff]
        %v301 = vld [vmem:[%s229 + $0xe0] sm:$0xff]
        %v302 = vld [vmem:[%s229 + $0xe8] sm:$0xff]
        %v303 = vld [vmem:[%s229 + $0xf0] sm:$0xff]
        %v304 = vld [vmem:[%s229 + $0xf8] sm:$0xff]
        %305 = vmatpush.msra.mxu0 %v288
        %306 = vmatpush.msra.mxu0 %v287
        %307 = vmatpush.msra.mxu0 %v286
        %308 = vmatpush.msra.mxu0 %v285
        %309 = vmatpush.msra.mxu0 %v284
        %310 = vmatpush.msra.mxu0 %v283
        %311 = vmatpush.msra.mxu0 %v282
        %312 = vmatpush.msra.mxu0 %v281
        %313 = vmatpush.msra.mxu0 %v280
        %314 = vmatpush.msra.mxu0 %v279
        %315 = vmatpush.msra.mxu0 %v278
        %316 = vmatpush.msra.mxu0 %v277
        %317 = vmatpush.msra.mxu0 %v276
        %318 = vmatpush.msra.mxu0 %v275
        %319 = vmatpush.msra.mxu0 %v274
        %320 = vmatpush.msra.mxu0 %v273
        %321 = vmatmul.f32.gmra.mxu0 %v271
        %v322 = vpop.f32.mrf.mxu0
        %v323 = vadd.f32 0.0, %v322
        %324 = vdwg.mxu0
        %325 = vmatpush.msra.mxu0 %v304
        %326 = vmatpush.msra.mxu0 %v303
        %327 = vmatpush.msra.mxu0 %v302
        %328 = vmatpush.msra.mxu0 %v301
        %329 = vmatpush.msra.mxu0 %v300
        %330 = vmatpush.msra.mxu0 %v299
        %331 = vmatpush.msra.mxu0 %v298
        %332 = vmatpush.msra.mxu0 %v297
        %333 = vmatpush.msra.mxu0 %v296
        %334 = vmatpush.msra.mxu0 %v295
        %335 = vmatpush.msra.mxu0 %v294
        %336 = vmatpush.msra.mxu0 %v293
        %337 = vmatpush.msra.mxu0 %v292
        %338 = vmatpush.msra.mxu0 %v291
        %339 = vmatpush.msra.mxu0 %v290
        %340 = vmatpush.msra.mxu0 %v289
        %341 = vmatmul.f32.gmra.mxu0 %v272
        %v342 = vpop.f32.mrf.mxu0
        %v343 = vadd.f32 %v323, %v342
        %344 = vdwg.mxu0
        %v345 = vadd.f32 %v270, %v343
        %346 = vst [vmem:[#allocation2] sm:$0xff] %v345
        %p347 = scmp.eq.s32.totalorder %s28, 3
        // Predicated region
        $region49: #{tpu_custom_call.1} parent=31 // pred_check
          %p348 = pneg %p347
        $region50: #{tpu_custom_call.1} parent=31 // pred_check_branch
          %350 = sbr.rel (%p348) target = $region52
        $region51: #{tpu_custom_call.1} parent=31 // pred_region
          %v351 = vld [vmem:[#allocation2] sm:$0xff]
          %v352 = vmul.f32 %v351, %v351
          %353 = vadd.xlane.f32.xlu0 %v352
          %v354 = vpop.xlane.xlu0 %353
          %v355 = vrsqrt.pop %v354
          %v356 = vmul.f32 %v355, %v354
          %v357 = vmul.f32 %v356, %v355
          %v358 = vmul.f32 0.5, %v357
          %v359 = vsub.f32 1.5, %v358
          %v360 = vmul.f32 %v355, %v359
          %vm361 = vweird.f32 %v354
          %vm362 = vweird.f32 %v355
          %vm363 = vmor %vm361, %vm362
          %v364 = vsel %vm363, %v355, %v360
          %v365 = vmul.f32 %v351, %v364
          %v366 = vld [vmem:[#allocation8] sm:$0xff]
          %v367 = vld [vmem:[#allocation8 + $0x8] sm:$0xff]
          %v368 = vld [vmem:[#allocation8 + $0x10] sm:$0xff]
          %v369 = vld [vmem:[#allocation8 + $0x18] sm:$0xff]
          %v370 = vld [vmem:[#allocation8 + $0x20] sm:$0xff]
          %v371 = vld [vmem:[#allocation8 + $0x28] sm:$0xff]
          %v372 = vld [vmem:[#allocation8 + $0x30] sm:$0xff]
          %v373 = vld [vmem:[#allocation8 + $0x38] sm:$0xff]
          %v374 = vld [vmem:[#allocation8 + $0x40] sm:$0xff]
          %v375 = vld [vmem:[#allocation8 + $0x48] sm:$0xff]
          %v376 = vld [vmem:[#allocation8 + $0x50] sm:$0xff]
          %v377 = vld [vmem:[#allocation8 + $0x58] sm:$0xff]
          %v378 = vld [vmem:[#allocation8 + $0x60] sm:$0xff]
          %v379 = vld [vmem:[#allocation8 + $0x68] sm:$0xff]
          %v380 = vld [vmem:[#allocation8 + $0x70] sm:$0xff]
          %v381 = vld [vmem:[#allocation8 + $0x78] sm:$0xff]
          %v382 = vld [vmem:[#allocation8 + $0x80] sm:$0xff]
          %v383 = vld [vmem:[#allocation8 + $0x88] sm:$0xff]
          %v384 = vld [vmem:[#allocation8 + $0x90] sm:$0xff]
          %v385 = vld [vmem:[#allocation8 + $0x98] sm:$0xff]
          %v386 = vld [vmem:[#allocation8 + $0xa0] sm:$0xff]
          %v387 = vld [vmem:[#allocation8 + $0xa8] sm:$0xff]
          %v388 = vld [vmem:[#allocation8 + $0xb0] sm:$0xff]
          %v389 = vld [vmem:[#allocation8 + $0xb8] sm:$0xff]
          %v390 = vld [vmem:[#allocation8 + $0xc0] sm:$0xff]
          %v391 = vld [vmem:[#allocation8 + $0xc8] sm:$0xff]
          %v392 = vld [vmem:[#allocation8 + $0xd0] sm:$0xff]
          %v393 = vld [vmem:[#allocation8 + $0xd8] sm:$0xff]
          %v394 = vld [vmem:[#allocation8 + $0xe0] sm:$0xff]
          %v395 = vld [vmem:[#allocation8 + $0xe8] sm:$0xff]
          %v396 = vld [vmem:[#allocation8 + $0xf0] sm:$0xff]
          %v397 = vld [vmem:[#allocation8 + $0xf8] sm:$0xff]
          %398 = vmatpush.msra.mxu0 %v396
          %399 = vmatpush.msra.mxu0 %v394
          %400 = vmatpush.msra.mxu0 %v392
          %401 = vmatpush.msra.mxu0 %v390
          %402 = vmatpush.msra.mxu0 %v388
          %403 = vmatpush.msra.mxu0 %v386
          %404 = vmatpush.msra.mxu0 %v384
          %405 = vmatpush.msra.mxu0 %v382
          %406 = vmatpush.msra.mxu0 %v380
          %407 = vmatpush.msra.mxu0 %v378
          %408 = vmatpush.msra.mxu0 %v376
          %409 = vmatpush.msra.mxu0 %v374
          %410 = vmatpush.msra.mxu0 %v372
          %411 = vmatpush.msra.mxu0 %v370
          %412 = vmatpush.msra.mxu0 %v368
          %413 = vmatpush.msra.mxu0 %v366
          %414 = vmatmul.f32.gmra.mxu0 %v365
          %v415 = vpop.f32.mrf.mxu0
          %v416 = vadd.f32 0.0, %v415
          %417 = vdwg.mxu0
          %418 = vmatpush.msra.mxu0 %v397
          %419 = vmatpush.msra.mxu0 %v395
          %420 = vmatpush.msra.mxu0 %v393
          %421 = vmatpush.msra.mxu0 %v391
          %422 = vmatpush.msra.mxu0 %v389
          %423 = vmatpush.msra.mxu0 %v387
          %424 = vmatpush.msra.mxu0 %v385
          %425 = vmatpush.msra.mxu0 %v383
          %426 = vmatpush.msra.mxu0 %v381
          %427 = vmatpush.msra.mxu0 %v379
          %428 = vmatpush.msra.mxu0 %v377
          %429 = vmatpush.msra.mxu0 %v375
          %430 = vmatpush.msra.mxu0 %v373
          %431 = vmatpush.msra.mxu0 %v371
          %432 = vmatpush.msra.mxu0 %v369
          %433 = vmatpush.msra.mxu0 %v367
          %434 = vmatmul.f32.gmra.mxu0 %v365
          %v435 = vpop.f32.mrf.mxu0
          %v436 = vadd.f32 0.0, %v435
          %437 = vdwg.mxu0
          %438 = vst [vmem:[%s262] sm:$0xff] %v416
          %439 = vst [vmem:[%s262 + $0x8] sm:$0xff] %v436
        $region52: #{tpu_custom_call.1} parent=31 // pred_fallthru
          _
        %s440 = sand.u32 %s118, 1
        %s441 = scalar_lea.sflag [#allocation5], %s440
        %s442 = sand.u32 %s118, 1
        %s443 = smul.addr %s442, 16
        %s444 = scalar_lea.vmem [#allocation9], %s443
        // Predicated region
        $region53: #{tpu_custom_call.1} parent=31 // pred_check
          %p445 = pneg %p128
        $region54: #{tpu_custom_call.1} parent=31 // pred_check_branch
          %447 = sbr.rel (%p445) target = $region56
        $region55: #{tpu_custom_call.1} parent=31 // pred_region
          %449 = vsyncadd %s441, 0
          %s450 = smul.addr %s27, 2
          %s451 = smul.addr %s450, 8
          %s452 = scalar_lea.hbm %s3, %s451
          %s454 = sshll.u32 %s444, 4
          %s455 = int_to_ptr.vmem [resolvable:$true] %s454
          %s456 = sshll.u32 %s452, 4
          %s457 = int_to_ptr.hbm [resolvable:$true] %s456
          %459 = dma.vmem_to_hbm [thread:$0]  %s455, 256, %s457, %s441
        $region56: #{tpu_custom_call.1} parent=31 // pred_fallthru
          _
      $region32: #{tpu_custom_call.1} parent=5 // pred_fallthru
        _
      %p460 = scmp.le.s32.totalorder 2, %s18
      // Predicated region
      $region57: #{tpu_custom_call.1} parent=5 // pred_check
        %p461 = pneg %p460
      $region58: #{tpu_custom_call.1} parent=5 // pred_check_branch
        %463 = sbr.rel (%p461) target = $region60
      $region59: #{tpu_custom_call.1} parent=5 // pred_region
        %s464 = ssub.s32 %s18, 2
        // Predicated region
        $region61: #{tpu_custom_call.1} parent=59 // pred_check
          %p465 = pneg %p134
        $region62: #{tpu_custom_call.1} parent=59 // pred_check_branch
          %467 = sbr.rel (%p465) target = $region64
        $region63: #{tpu_custom_call.1} parent=59 // pred_region
          %s468 = sand.u32 %s119, 1
          %s469 = scalar_lea.sflag [#allocation5], %s468
          %s470 = sand.u32 %s119, 1
          %s471 = smul.addr %s470, 16
          %s472 = scalar_lea.vmem [#allocation9], %s471
          %474 = dma.done %s469, 256
        $region64: #{tpu_custom_call.1} parent=59 // pred_fallthru
          _
      $region60: #{tpu_custom_call.1} parent=5 // pred_fallthru
        _
    $region6: #{tpu_custom_call.1} parent=1 // loop_footer
      %s22 = sadd.s32 1, %s18
    $region7: #{tpu_custom_call.1} parent=1 // loop_footer_branch
      %17 = sbr.rel target = $region3
    $region8: #{tpu_custom_call.1} parent=1 // loop_exit
      _
    %475 = vsyncpa [#allocation4], 1
    %s476 = scalar_lea.sflag [#allocation4], 1
    %477 = vsyncpa %s476, 1
    %478 = vsyncpa [#allocation7], 1
    %s479 = scalar_lea.sflag [#allocation7], 1
    %480 = vsyncpa %s479, 1
    %481 = vsyncpa [#allocation5], 1
    %s482 = scalar_lea.sflag [#allocation5], 1
    %483 = vsyncpa %s482, 1

</llo_original>
